<compile_context>
chip_gen: v7x
topology: tpu7x:2x2x1
jax: 0.10.0
libtpu: 0.0.40
codegen_flags: <defaults>
</compile_context>

<pallas_src>
import functools

import jax
import jax.numpy as jnp
from jax.experimental import pallas as pl
from jax.experimental.pallas import tpu as pltpu


def cbow_kernel(xidx_ref,      # SMEM  (C,) int32          -- scalar-prefetched context indices
                emb_hbm,       # ANY   (n_word, n_dim) f32 -- embedding table, stays in HBM
                wfold_ref,     # VMEM  (n_dim, hidden) f32 -- project^T @ linear1^T (folded, resident)
                b1_ref,        # VMEM  (1, hidden) f32     -- linear1.bias (resident)
                w2t_ref,       # VMEM  (hidden, tn) bf16   -- linear2.weight^T, vocab tile j (streams)
                b2_ref,        # VMEM  (1, tn) f32         -- linear2.bias, vocab tile j (streams)
                out_ref,       # VMEM  (n_tiles, tn) f32   -- resident output (row j = vocab tile j)
                emb_buf,       # VMEM  (C, n_dim) f32 scratch -- gathered embeddings
                emb_sem,       # DMA sems (C,)
                h_ref,         # VMEM  (1, hidden) bf16 scratch -- hidden activations
                m_sc,          # VMEM  (1, 1) f32 scratch  -- online-softmax running max
                l_sc):         # VMEM  (1, 1) f32 scratch  -- online-softmax running sum-exp
    j = pl.program_id(0)
    C = emb_buf.shape[0]

    @pl.when(j == 0)
    def _prologue():
        # Fused embedding gather: DMA exactly C rows HBM -> VMEM.
        copies = [
            pltpu.make_async_copy(
                emb_hbm.at[pl.ds(xidx_ref[c], 1), :],
                emb_buf.at[pl.ds(c, 1), :],
                emb_sem.at[c],
            )
            for c in range(C)
        ]
        for cp in copies:
            cp.start()
        for cp in copies:
            cp.wait()

        # Reassociated bag-of-words + folded project/linear1:
        #   relu(sum(e) @ (Wp^T @ W1^T) + b1)  ==  relu(sum(e @ Wp^T) @ W1^T + b1)
        e_sum = jnp.sum(emb_buf[...], axis=0, keepdims=True)                 # (1, n_dim) f32
        h = jnp.dot(e_sum, wfold_ref[...],
                    preferred_element_type=jnp.float32) + b1_ref[...]        # (1, hidden) f32
        h_ref[...] = jnp.maximum(h, 0.0).astype(h_ref.dtype)                 # bf16 for the MXU stream

        # Init online-softmax stats.
        m_sc[...] = jnp.full((1, 1), -jnp.inf, jnp.float32)
        l_sc[...] = jnp.zeros((1, 1), jnp.float32)

    # Per vocab tile: logits_j = h @ W2^T[:, tile j] + b2[tile j]  (bf16 x bf16 -> f32 acc).
    logits = jnp.dot(h_ref[...], w2t_ref[...],
                     preferred_element_type=jnp.float32) + b2_ref[...]       # (1, tn) f32
    out_ref[pl.ds(j, 1), :] = logits                                         # lane-dense store

    # Online log-softmax stats (free on EUP/XLU slots while the next tile streams).
    t_max = jnp.max(logits, keepdims=True)                                   # (1, 1)
    m_old = m_sc[...]
    m_new = jnp.maximum(m_old, t_max)
    l_sc[...] = (l_sc[...] * jnp.exp(m_old - m_new)
                 + jnp.sum(jnp.exp(logits - m_new), keepdims=True))
    m_sc[...] = m_new

    @pl.when(j == pl.num_programs(0) - 1)
    def _finalize():
        # log_softmax = logits - (m + log(sum_exp)); no full-vocab exp/reduce tail.
        lse = m_sc[...] + jnp.log(l_sc[...])
        out_ref[...] = out_ref[...] - lse


def prepare_params(params):
    """One-time (load-time) repack:
       * fold project into linear1:  w_fold = Wp^T @ W1^T  (n_dim, hidden), f32
       * transpose linear2 weight to x @ W layout and cast to bf16 (the streamed operand)
       * lift biases to 2-D (b2 kept f32: its stream is negligible, bias stays exact)."""
    emb_table, w_proj, w1, b1, w2, b2 = params
    w_fold = jnp.dot(w_proj.T, w1.T, precision=jax.lax.Precision.HIGHEST)    # (n_dim, hidden)
    return (
        jnp.asarray(emb_table, jnp.float32),        # (n_word, n_dim)
        jnp.asarray(w_fold, jnp.float32),           # (n_dim, hidden)
        jnp.asarray(b1[None, :], jnp.float32),      # (1, hidden)
        jnp.asarray(w2.T, jnp.bfloat16),            # (hidden, n_word)  <- streamed, bf16
        jnp.asarray(b2[None, :], jnp.float32),      # (1, n_word)
    )


@functools.partial(jax.jit, static_argnames=("tn",))
def cbow_forward(x_idx, packed, *, tn=8192):
    """x_idx: (C,) int32 context indices. Returns (1, n_word) f32 log-probs."""
    emb_table, w_fold, b1_2d, w2t, b2_2d = packed
    n_word, n_dim = emb_table.shape
    hidden = w_fold.shape[1]
    C = x_idx.shape[0]

    tn = min(tn, n_word)
    # TODO(synk): pad a ragged vocab tail instead of requiring divisibility.
    assert tn % 128 == 0 and n_word % tn == 0, "n_word must be a multiple of tn (and tn of 128)"
    n_tiles = n_word // tn

    grid_spec = pltpu.PrefetchScalarGridSpec(
        num_scalar_prefetch=1,          # x_idx -> SMEM; gather is fused into the kernel
        grid=(n_tiles,),
        in_specs=[
            pl.BlockSpec(memory_space=pl.ANY),                         # embedding table (HBM)
            pl.BlockSpec((n_dim, hidden), lambda j, idx: (0, 0)),      # w_fold (resident)
            pl.BlockSpec((1, hidden), lambda j, idx: (0, 0)),          # b1     (resident)
            pl.BlockSpec((hidden, tn), lambda j, idx: (0, j)),         # w2t bf16 vocab tile (streams)
            pl.BlockSpec((1, tn), lambda j, idx: (0, j)),              # b2  vocab tile (streams)
        ],
        out_specs=pl.BlockSpec((n_tiles, tn), lambda j, idx: (0, 0)),  # resident across vocab axis
        scratch_shapes=[
            pltpu.VMEM((C, n_dim), emb_table.dtype),                   # gathered embeddings
            pltpu.SemaphoreType.DMA((C,)),                             # one sem per gather DMA
            pltpu.VMEM((1, hidden), jnp.bfloat16),                     # hidden activations (bf16)
            pltpu.VMEM((1, 1), jnp.float32),                           # running max
            pltpu.VMEM((1, 1), jnp.float32),                           # running sum-exp
        ],
    )

    out_tiled = pl.pallas_call(
        cbow_kernel,
        out_shape=jax.ShapeDtypeStruct((n_tiles, tn), jnp.float32),
        grid_spec=grid_spec,
        compiler_params=pltpu.CompilerParams(
            # The single grid axis carries the resident output + softmax stats -> arbitrary.
            dimension_semantics=("arbitrary",),
            # 48 MiB: safe on v7x (64 MiB physical), ample headroom on v5e/v6e (128 MiB).
            vmem_limit_bytes=48 * 1024 * 1024,
        ),
    )(x_idx.astype(jnp.int32), emb_table, w_fold, b1_2d, w2t, b2_2d)

    # Row j of the tiled output is vocab slice [j*tn, (j+1)*tn): a row-major
    # flatten restores the (1, n_word) layout of the PyTorch module.
    return out_tiled.reshape(1, n_word)


def cbow_reference(x_idx, params):
    """Plain-JAX f32 reference mirroring the PyTorch forward exactly."""
    emb_table, w_proj, w1, b1, w2, b2 = params
    e = jnp.take(emb_table, x_idx, axis=0)
    p = e @ w_proj.T
    s = jnp.sum(p, axis=0, keepdims=True)
    h = jax.nn.relu(s @ w1.T + b1)
    logits = h @ w2.T + b2
    return jax.nn.log_softmax(logits, axis=1)


def init_params(key, n_word, n_dim, hidden=128):
    """Deterministic synthetic init matching the PyTorch module's shapes."""
    k = jax.random.split(key, 6)
    emb_table = jax.random.normal(k[0], (n_word, n_dim), jnp.float32)       # nn.Embedding
    w_proj = jax.random.normal(k[1], (n_dim, n_dim), jnp.float32) * 0.1     # Linear(n_dim, n_dim, bias=False)
    w1 = jax.random.normal(k[2], (hidden, n_dim), jnp.float32) * 0.1        # Linear(n_dim, 128)
    b1 = jax.random.normal(k[3], (hidden,), jnp.float32) * 0.1
    w2 = jax.random.normal(k[4], (n_word, hidden), jnp.float32) * 0.1       # Linear(128, n_word)
    b2 = jax.random.normal(k[5], (n_word,), jnp.float32) * 0.1
    return (emb_table, w_proj, w1, b1, w2, b2)


if __name__ == "__main__":
    n_word = 1024       # small synthetic vocab (multiple of 128 -> lane-dense tiles)
    n_dim = 32          # embedding dim
    hidden = 128
    context_size = 2    # forward consumes C = 2*context_size indices
    C = 2 * context_size

    key = jax.random.PRNGKey(0)
    kp, kx = jax.random.split(key)
    params = init_params(kp, n_word, n_dim, hidden)
    x_idx = jax.random.randint(kx, (C,), 0, n_word, dtype=jnp.int32)

    packed = prepare_params(params)     # load-time repack: fold + transpose + bf16, no per-call cost
    ref = cbow_reference(x_idx, params)

    # Small tn exercises the multi-tile online-softmax path (4 tiles at this demo vocab);
    # production calls should use the default tn=8192 (or larger with bf16/fp8 on v7x).
    out_multi = jax.block_until_ready(cbow_forward(x_idx, packed, tn=256))
    out_single = jax.block_until_ready(cbow_forward(x_idx, packed))   # tn clamps to n_word -> 1 tile

    for out in (out_multi, out_single):
        assert out.shape == (1, n_word)
        # bf16 weight/activation stream -> tolerance deliberately loosened vs the f32 reference.
        assert jnp.allclose(out, ref, atol=5e-2, rtol=1e-3), "Pallas output mismatch vs reference"
    assert jnp.allclose(out_multi, out_single, atol=1e-5, rtol=1e-5), "tile-count dependence"

    print("KERNEL_OK")
</pallas_src>

<mosaic_0001>
module attributes {stable_mosaic.version = 11 : i64} {
  func.func @cbow_kernel(%arg0: i32, %arg1: memref<4xi32, #tpu.memory_space<smem>>, %arg2: memref<1024x32xf32, #tpu.memory_space<any>>, %arg3: memref<32x128xf32, #tpu.memory_space<vmem>>, %arg4: memref<1x128xf32, #tpu.memory_space<vmem>>, %arg5: memref<128x256xbf16, #tpu.memory_space<vmem>>, %arg6: memref<1x256xf32, #tpu.memory_space<vmem>>, %arg7: memref<4x256xf32, #tpu.memory_space<vmem>>, %arg8: memref<4x32xf32, #tpu.memory_space<vmem>>, %arg9: memref<4x!tpu.dma_semaphore, #tpu.memory_space<semaphore_mem>>, %arg10: memref<1x128xbf16, #tpu.memory_space<vmem>>, %arg11: memref<1x1xf32, #tpu.memory_space<vmem>>, %arg12: memref<1x1xf32, #tpu.memory_space<vmem>>) attributes {dimension_semantics = [#tpu.dimension_semantics<arbitrary>], iteration_bounds = array<i64: 4>, scalar_prefetch = 1 : i64, scratch_operands = 5 : i64, tpu.core_type = #tpu.core_type<tc>, window_params = [{}, {pipeline_mode = #tpu.pipeline_mode<synchronous>, transform_indices = @transform_1, window_bounds = array<i64: 32, 128>}, {pipeline_mode = #tpu.pipeline_mode<synchronous>, transform_indices = @transform_2, window_bounds = array<i64: 1, 128>}, {transform_indices = @transform_3, window_bounds = array<i64: 128, 256>}, {transform_indices = @transform_4, window_bounds = array<i64: 1, 256>}, {pipeline_mode = #tpu.pipeline_mode<synchronous>, transform_indices = @transform_5, window_bounds = array<i64: 4, 256>}]} {
    %c0_i32 = arith.constant 0 : i32
    %0 = arith.cmpi eq, %arg0, %c0_i32 : i32
    %1 = arith.extui %0 : i1 to i32
    %c0_i32_0 = arith.constant 0 : i32
    %2 = arith.cmpi ne, %1, %c0_i32_0 : i32
    scf.if %2 {
      %c0_18 = arith.constant 0 : index
      %35 = memref.load %arg1[%c0_18] : memref<4xi32, #tpu.memory_space<smem>>
      %c1 = arith.constant 1 : index
      %36 = memref.load %arg1[%c1] : memref<4xi32, #tpu.memory_space<smem>>
      %c2 = arith.constant 2 : index
      %37 = memref.load %arg1[%c2] : memref<4xi32, #tpu.memory_space<smem>>
      %c3 = arith.constant 3 : index
      %38 = memref.load %arg1[%c3] : memref<4xi32, #tpu.memory_space<smem>>
      %c0_i32_19 = arith.constant 0 : i32
      %c0_i32_20 = arith.constant 0 : i32
      %39 = tpu.memref_slice %arg2[%35, %c0_i32_20] : memref<1024x32xf32, #tpu.memory_space<any>> -> memref<1x32xf32, #tpu.memory_space<any>>
      %c0_i32_21 = arith.constant 0 : i32
      %c0_i32_22 = arith.constant 0 : i32
      %40 = tpu.memref_slice %arg8[%c0_i32_21, %c0_i32_22] : memref<4x32xf32, #tpu.memory_space<vmem>> -> memref<1x32xf32, #tpu.memory_space<vmem>>
      %41 = tpu.memref_slice %arg9[%c0_i32_19] : memref<4x!tpu.dma_semaphore, #tpu.memory_space<semaphore_mem>> -> memref<1x!tpu.dma_semaphore, #tpu.memory_space<semaphore_mem>>
      %42 = tpu.memref_squeeze %41 : memref<1x!tpu.dma_semaphore, #tpu.memory_space<semaphore_mem>> -> memref<!tpu.dma_semaphore, #tpu.memory_space<semaphore_mem>>
      tpu.enqueue_dma source(%39 : memref<1x32xf32, #tpu.memory_space<any>>) target(%40 : memref<1x32xf32, #tpu.memory_space<vmem>>) target_semaphore(%42 : memref<!tpu.dma_semaphore, #tpu.memory_space<semaphore_mem>>)
      %c1_i32 = arith.constant 1 : i32
      %c0_i32_23 = arith.constant 0 : i32
      %43 = tpu.memref_slice %arg2[%36, %c0_i32_23] : memref<1024x32xf32, #tpu.memory_space<any>> -> memref<1x32xf32, #tpu.memory_space<any>>
      %c1_i32_24 = arith.constant 1 : i32
      %c0_i32_25 = arith.constant 0 : i32
      %44 = tpu.memref_slice %arg8[%c1_i32_24, %c0_i32_25] : memref<4x32xf32, #tpu.memory_space<vmem>> -> memref<1x32xf32, #tpu.memory_space<vmem>>
      %45 = tpu.memref_slice %arg9[%c1_i32] : memref<4x!tpu.dma_semaphore, #tpu.memory_space<semaphore_mem>> -> memref<1x!tpu.dma_semaphore, #tpu.memory_space<semaphore_mem>>
      %46 = tpu.memref_squeeze %45 : memref<1x!tpu.dma_semaphore, #tpu.memory_space<semaphore_mem>> -> memref<!tpu.dma_semaphore, #tpu.memory_space<semaphore_mem>>
      tpu.enqueue_dma source(%43 : memref<1x32xf32, #tpu.memory_space<any>>) target(%44 : memref<1x32xf32, #tpu.memory_space<vmem>>) target_semaphore(%46 : memref<!tpu.dma_semaphore, #tpu.memory_space<semaphore_mem>>)
      %c2_i32 = arith.constant 2 : i32
      %c0_i32_26 = arith.constant 0 : i32
      %47 = tpu.memref_slice %arg2[%37, %c0_i32_26] : memref<1024x32xf32, #tpu.memory_space<any>> -> memref<1x32xf32, #tpu.memory_space<any>>
      %c2_i32_27 = arith.constant 2 : i32
      %c0_i32_28 = arith.constant 0 : i32
      %48 = tpu.memref_slice %arg8[%c2_i32_27, %c0_i32_28] : memref<4x32xf32, #tpu.memory_space<vmem>> -> memref<1x32xf32, #tpu.memory_space<vmem>>
      %49 = tpu.memref_slice %arg9[%c2_i32] : memref<4x!tpu.dma_semaphore, #tpu.memory_space<semaphore_mem>> -> memref<1x!tpu.dma_semaphore, #tpu.memory_space<semaphore_mem>>
      %50 = tpu.memref_squeeze %49 : memref<1x!tpu.dma_semaphore, #tpu.memory_space<semaphore_mem>> -> memref<!tpu.dma_semaphore, #tpu.memory_space<semaphore_mem>>
      tpu.enqueue_dma source(%47 : memref<1x32xf32, #tpu.memory_space<any>>) target(%48 : memref<1x32xf32, #tpu.memory_space<vmem>>) target_semaphore(%50 : memref<!tpu.dma_semaphore, #tpu.memory_space<semaphore_mem>>)
      %c3_i32_29 = arith.constant 3 : i32
      %c0_i32_30 = arith.constant 0 : i32
      %51 = tpu.memref_slice %arg2[%38, %c0_i32_30] : memref<1024x32xf32, #tpu.memory_space<any>> -> memref<1x32xf32, #tpu.memory_space<any>>
      %c3_i32_31 = arith.constant 3 : i32
      %c0_i32_32 = arith.constant 0 : i32
      %52 = tpu.memref_slice %arg8[%c3_i32_31, %c0_i32_32] : memref<4x32xf32, #tpu.memory_space<vmem>> -> memref<1x32xf32, #tpu.memory_space<vmem>>
      %53 = tpu.memref_slice %arg9[%c3_i32_29] : memref<4x!tpu.dma_semaphore, #tpu.memory_space<semaphore_mem>> -> memref<1x!tpu.dma_semaphore, #tpu.memory_space<semaphore_mem>>
      %54 = tpu.memref_squeeze %53 : memref<1x!tpu.dma_semaphore, #tpu.memory_space<semaphore_mem>> -> memref<!tpu.dma_semaphore, #tpu.memory_space<semaphore_mem>>
      tpu.enqueue_dma source(%51 : memref<1x32xf32, #tpu.memory_space<any>>) target(%52 : memref<1x32xf32, #tpu.memory_space<vmem>>) target_semaphore(%54 : memref<!tpu.dma_semaphore, #tpu.memory_space<semaphore_mem>>)
      %c0_i32_33 = arith.constant 0 : i32
      %c0_i32_34 = arith.constant 0 : i32
      %55 = tpu.memref_slice %arg2[%35, %c0_i32_34] : memref<1024x32xf32, #tpu.memory_space<any>> -> memref<1x32xf32, #tpu.memory_space<any>>
      %c0_i32_35 = arith.constant 0 : i32
      %c0_i32_36 = arith.constant 0 : i32
      %56 = tpu.memref_slice %arg8[%c0_i32_35, %c0_i32_36] : memref<4x32xf32, #tpu.memory_space<vmem>> -> memref<1x32xf32, #tpu.memory_space<vmem>>
      %57 = tpu.memref_slice %arg9[%c0_i32_33] : memref<4x!tpu.dma_semaphore, #tpu.memory_space<semaphore_mem>> -> memref<1x!tpu.dma_semaphore, #tpu.memory_space<semaphore_mem>>
      %58 = tpu.memref_squeeze %57 : memref<1x!tpu.dma_semaphore, #tpu.memory_space<semaphore_mem>> -> memref<!tpu.dma_semaphore, #tpu.memory_space<semaphore_mem>>
      tpu.wait_dma2 semaphore(%58 : memref<!tpu.dma_semaphore, #tpu.memory_space<semaphore_mem>>) src(%55 : memref<1x32xf32, #tpu.memory_space<any>>) dst(%56 : memref<1x32xf32, #tpu.memory_space<vmem>>)
      %c1_i32_37 = arith.constant 1 : i32
      %c0_i32_38 = arith.constant 0 : i32
      %59 = tpu.memref_slice %arg2[%36, %c0_i32_38] : memref<1024x32xf32, #tpu.memory_space<any>> -> memref<1x32xf32, #tpu.memory_space<any>>
      %c1_i32_39 = arith.constant 1 : i32
      %c0_i32_40 = arith.constant 0 : i32
      %60 = tpu.memref_slice %arg8[%c1_i32_39, %c0_i32_40] : memref<4x32xf32, #tpu.memory_space<vmem>> -> memref<1x32xf32, #tpu.memory_space<vmem>>
      %61 = tpu.memref_slice %arg9[%c1_i32_37] : memref<4x!tpu.dma_semaphore, #tpu.memory_space<semaphore_mem>> -> memref<1x!tpu.dma_semaphore, #tpu.memory_space<semaphore_mem>>
      %62 = tpu.memref_squeeze %61 : memref<1x!tpu.dma_semaphore, #tpu.memory_space<semaphore_mem>> -> memref<!tpu.dma_semaphore, #tpu.memory_space<semaphore_mem>>
      tpu.wait_dma2 semaphore(%62 : memref<!tpu.dma_semaphore, #tpu.memory_space<semaphore_mem>>) src(%59 : memref<1x32xf32, #tpu.memory_space<any>>) dst(%60 : memref<1x32xf32, #tpu.memory_space<vmem>>)
      %c2_i32_41 = arith.constant 2 : i32
      %c0_i32_42 = arith.constant 0 : i32
      %63 = tpu.memref_slice %arg2[%37, %c0_i32_42] : memref<1024x32xf32, #tpu.memory_space<any>> -> memref<1x32xf32, #tpu.memory_space<any>>
      %c2_i32_43 = arith.constant 2 : i32
      %c0_i32_44 = arith.constant 0 : i32
      %64 = tpu.memref_slice %arg8[%c2_i32_43, %c0_i32_44] : memref<4x32xf32, #tpu.memory_space<vmem>> -> memref<1x32xf32, #tpu.memory_space<vmem>>
      %65 = tpu.memref_slice %arg9[%c2_i32_41] : memref<4x!tpu.dma_semaphore, #tpu.memory_space<semaphore_mem>> -> memref<1x!tpu.dma_semaphore, #tpu.memory_space<semaphore_mem>>
      %66 = tpu.memref_squeeze %65 : memref<1x!tpu.dma_semaphore, #tpu.memory_space<semaphore_mem>> -> memref<!tpu.dma_semaphore, #tpu.memory_space<semaphore_mem>>
      tpu.wait_dma2 semaphore(%66 : memref<!tpu.dma_semaphore, #tpu.memory_space<semaphore_mem>>) src(%63 : memref<1x32xf32, #tpu.memory_space<any>>) dst(%64 : memref<1x32xf32, #tpu.memory_space<vmem>>)
      %c3_i32_45 = arith.constant 3 : i32
      %c0_i32_46 = arith.constant 0 : i32
      %67 = tpu.memref_slice %arg2[%38, %c0_i32_46] : memref<1024x32xf32, #tpu.memory_space<any>> -> memref<1x32xf32, #tpu.memory_space<any>>
      %c3_i32_47 = arith.constant 3 : i32
      %c0_i32_48 = arith.constant 0 : i32
      %68 = tpu.memref_slice %arg8[%c3_i32_47, %c0_i32_48] : memref<4x32xf32, #tpu.memory_space<vmem>> -> memref<1x32xf32, #tpu.memory_space<vmem>>
      %69 = tpu.memref_slice %arg9[%c3_i32_45] : memref<4x!tpu.dma_semaphore, #tpu.memory_space<semaphore_mem>> -> memref<1x!tpu.dma_semaphore, #tpu.memory_space<semaphore_mem>>
      %70 = tpu.memref_squeeze %69 : memref<1x!tpu.dma_semaphore, #tpu.memory_space<semaphore_mem>> -> memref<!tpu.dma_semaphore, #tpu.memory_space<semaphore_mem>>
      tpu.wait_dma2 semaphore(%70 : memref<!tpu.dma_semaphore, #tpu.memory_space<semaphore_mem>>) src(%67 : memref<1x32xf32, #tpu.memory_space<any>>) dst(%68 : memref<1x32xf32, #tpu.memory_space<vmem>>)
      %c0_49 = arith.constant 0 : index
      %c0_50 = arith.constant 0 : index
      %71 = vector.load %arg8[%c0_49, %c0_50] : memref<4x32xf32, #tpu.memory_space<vmem>>, vector<4x32xf32>
      %cst_51 = arith.constant dense<0.000000e+00> : vector<32xf32>
      %72 = vector.multi_reduction <add>, %71, %cst_51 [0] : vector<4x32xf32> to vector<32xf32>
      %73 = vector.shape_cast %72 : vector<32xf32> to vector<1x32xf32>
      %c0_52 = arith.constant 0 : index
      %c0_53 = arith.constant 0 : index
      %74 = vector.load %arg3[%c0_52, %c0_53] : memref<32x128xf32, #tpu.memory_space<vmem>>, vector<32x128xf32>
      %cst_54 = arith.constant dense<0.000000e+00> : vector<1x128xf32>
      %75 = tpu.matmul %73, %74, %cst_54 {dimension_numbers = #tpu.dot_dimension_numbers<[1], [0], [0], [1], [0, 0, 1, 1], [], []>} : vector<1x32xf32>, vector<32x128xf32>, vector<1x128xf32> -> vector<1x128xf32>
      %c0_55 = arith.constant 0 : index
      %c0_56 = arith.constant 0 : index
      %76 = vector.load %arg4[%c0_55, %c0_56] : memref<1x128xf32, #tpu.memory_space<vmem>>, vector<1x128xf32>
      %77 = arith.addf %75, %76 : vector<1x128xf32>
      %cst_57 = arith.constant 0.000000e+00 : f32
      %78 = vector.broadcast %cst_57 : f32 to vector<1x128xf32>
      %79 = arith.maximumf %77, %78 : vector<1x128xf32>
      %80 = arith.truncf %79 : vector<1x128xf32> to vector<1x128xbf16>
      %c0_58 = arith.constant 0 : index
      %c0_59 = arith.constant 0 : index
      %81 = vector.load %arg10[%c0_58, %c0_59] : memref<1x128xbf16, #tpu.memory_space<vmem>>, vector<1x128xbf16>
      tpu.vector_store %arg10[%c0_58, %c0_59], %80 {strides = array<i32>} : memref<1x128xbf16, #tpu.memory_space<vmem>>, vector<1x128xbf16>,
      %cst_60 = arith.constant 0xFF800000 : f32
      %82 = vector.broadcast %cst_60 : f32 to vector<1x1xf32>
      %c0_61 = arith.constant 0 : index
      %c0_62 = arith.constant 0 : index
      %83 = vector.load %arg11[%c0_61, %c0_62] : memref<1x1xf32, #tpu.memory_space<vmem>>, vector<1x1xf32>
      tpu.vector_store %arg11[%c0_61, %c0_62], %82 {strides = array<i32>} : memref<1x1xf32, #tpu.memory_space<vmem>>, vector<1x1xf32>,
      %cst_63 = arith.constant 0.000000e+00 : f32
      %84 = vector.broadcast %cst_63 : f32 to vector<1x1xf32>
      %c0_64 = arith.constant 0 : index
      %c0_65 = arith.constant 0 : index
      %85 = vector.load %arg12[%c0_64, %c0_65] : memref<1x1xf32, #tpu.memory_space<vmem>>, vector<1x1xf32>
      tpu.vector_store %arg12[%c0_64, %c0_65], %84 {strides = array<i32>} : memref<1x1xf32, #tpu.memory_space<vmem>>, vector<1x1xf32>,
    } else {
    }
    %c0 = arith.constant 0 : index
    %c0_1 = arith.constant 0 : index
    %3 = vector.load %arg10[%c0, %c0_1] : memref<1x128xbf16, #tpu.memory_space<vmem>>, vector<1x128xbf16>
    %c0_2 = arith.constant 0 : index
    %c0_3 = arith.constant 0 : index
    %4 = vector.load %arg5[%c0_2, %c0_3] : memref<128x256xbf16, #tpu.memory_space<vmem>>, vector<128x256xbf16>
    %cst = arith.constant dense<0.000000e+00> : vector<1x256xf32>
    %5 = tpu.matmul %3, %4, %cst {dimension_numbers = #tpu.dot_dimension_numbers<[1], [0], [0], [1], [0, 0, 1, 1], [], []>} : vector<1x128xbf16>, vector<128x256xbf16>, vector<1x256xf32> -> vector<1x256xf32>
    %c0_4 = arith.constant 0 : index
    %c0_5 = arith.constant 0 : index
    %6 = vector.load %arg6[%c0_4, %c0_5] : memref<1x256xf32, #tpu.memory_space<vmem>>, vector<1x256xf32>
    %7 = arith.addf %5, %6 : vector<1x256xf32>
    %8 = arith.index_cast %arg0 : i32 to index
    %c0_6 = arith.constant 0 : index
    %9 = vector.load %arg7[%8, %c0_6] : memref<4x256xf32, #tpu.memory_space<vmem>>, vector<1x256xf32>
    tpu.vector_store %arg7[%8, %c0_6], %7 {strides = array<i32>} : memref<4x256xf32, #tpu.memory_space<vmem>>, vector<1x256xf32>,
    %10 = vector.shape_cast %7 : vector<1x256xf32> to vector<1x1x256xf32>
    %cst_7 = arith.constant dense<0xFF800000> : vector<1xf32>
    %11 = vector.multi_reduction <maximumf>, %10, %cst_7 [1, 2] : vector<1x1x256xf32> to vector<1xf32>
    %12 = vector.shape_cast %11 : vector<1xf32> to vector<1x1x1xf32>
    %13 = vector.extract %12[0, 0, 0] : f32 from vector<1x1x1xf32>
    %14 = vector.broadcast %13 : f32 to vector<1x1xf32>
    %c0_8 = arith.constant 0 : index
    %c0_9 = arith.constant 0 : index
    %15 = vector.load %arg11[%c0_8, %c0_9] : memref<1x1xf32, #tpu.memory_space<vmem>>, vector<1x1xf32>
    %16 = arith.maximumf %15, %14 : vector<1x1xf32>
    %c0_10 = arith.constant 0 : index
    %c0_11 = arith.constant 0 : index
    %17 = vector.load %arg12[%c0_10, %c0_11] : memref<1x1xf32, #tpu.memory_space<vmem>>, vector<1x1xf32>
    %18 = arith.subf %15, %16 : vector<1x1xf32>
    %19 = math.exp %18 : vector<1x1xf32>
    %20 = arith.mulf %17, %19 : vector<1x1xf32>
    %21 = vector.broadcast %16 : vector<1x1xf32> to vector<1x256xf32>
    %22 = arith.subf %7, %21 : vector<1x256xf32>
    %23 = math.exp %22 : vector<1x256xf32>
    %24 = vector.shape_cast %23 : vector<1x256xf32> to vector<1x1x256xf32>
    %cst_12 = arith.constant dense<0.000000e+00> : vector<1xf32>
    %25 = vector.multi_reduction <add>, %24, %cst_12 [1, 2] : vector<1x1x256xf32> to vector<1xf32>
    %26 = vector.shape_cast %25 : vector<1xf32> to vector<1x1x1xf32>
    %27 = vector.extract %26[0, 0, 0] : f32 from vector<1x1x1xf32>
    %28 = vector.broadcast %27 : f32 to vector<1x1xf32>
    %29 = arith.addf %20, %28 : vector<1x1xf32>
    %c0_13 = arith.constant 0 : index
    %c0_14 = arith.constant 0 : index
    %30 = vector.load %arg12[%c0_13, %c0_14] : memref<1x1xf32, #tpu.memory_space<vmem>>, vector<1x1xf32>
    tpu.vector_store %arg12[%c0_13, %c0_14], %29 {strides = array<i32>} : memref<1x1xf32, #tpu.memory_space<vmem>>, vector<1x1xf32>,
    %c0_15 = arith.constant 0 : index
    %c0_16 = arith.constant 0 : index
    %31 = vector.load %arg11[%c0_15, %c0_16] : memref<1x1xf32, #tpu.memory_space<vmem>>, vector<1x1xf32>
    tpu.vector_store %arg11[%c0_15, %c0_16], %16 {strides = array<i32>} : memref<1x1xf32, #tpu.memory_space<vmem>>, vector<1x1xf32>,
    %c3_i32 = arith.constant 3 : i32
    %32 = arith.cmpi eq, %arg0, %c3_i32 : i32
    %33 = arith.extui %32 : i1 to i32
    %c0_i32_17 = arith.constant 0 : i32
    %34 = arith.cmpi ne, %33, %c0_i32_17 : i32
    scf.if %34 {
      %c0_18 = arith.constant 0 : index
      %c0_19 = arith.constant 0 : index
      %35 = vector.load %arg11[%c0_18, %c0_19] : memref<1x1xf32, #tpu.memory_space<vmem>>, vector<1x1xf32>
      %c0_20 = arith.constant 0 : index
      %c0_21 = arith.constant 0 : index
      %36 = vector.load %arg12[%c0_20, %c0_21] : memref<1x1xf32, #tpu.memory_space<vmem>>, vector<1x1xf32>
      %37 = math.log %36 : vector<1x1xf32>
      %38 = arith.addf %35, %37 : vector<1x1xf32>
      %c0_22 = arith.constant 0 : index
      %c0_23 = arith.constant 0 : index
      %39 = vector.load %arg7[%c0_22, %c0_23] : memref<4x256xf32, #tpu.memory_space<vmem>>, vector<4x256xf32>
      %40 = vector.broadcast %38 : vector<1x1xf32> to vector<4x256xf32>
      %41 = arith.subf %39, %40 : vector<4x256xf32>
      %c0_24 = arith.constant 0 : index
      %c0_25 = arith.constant 0 : index
      %42 = vector.load %arg7[%c0_24, %c0_25] : memref<4x256xf32, #tpu.memory_space<vmem>>, vector<4x256xf32>
      tpu.vector_store %arg7[%c0_24, %c0_25], %41 {strides = array<i32>} : memref<4x256xf32, #tpu.memory_space<vmem>>, vector<4x256xf32>,
    } else {
    }
    return
  }
  func.func @transform_1(%arg0: i32, %arg1: memref<4xi32, #tpu.memory_space<smem>>) -> (i32, i32) {
    %c0_i32 = arith.constant 0 : i32
    %c0_i32_0 = arith.constant 0 : i32
    %c0_i32_1 = arith.constant 0 : i32
    return %c0_i32, %c0_i32_0 : i32, i32
  }
  func.func @transform_2(%arg0: i32, %arg1: memref<4xi32, #tpu.memory_space<smem>>) -> (i32, i32) {
    %c0_i32 = arith.constant 0 : i32
    %c0_i32_0 = arith.constant 0 : i32
    %c0_i32_1 = arith.constant 0 : i32
    return %c0_i32, %c0_i32_0 : i32, i32
  }
  func.func @transform_3(%arg0: i32, %arg1: memref<4xi32, #tpu.memory_space<smem>>) -> (i32, i32) {
    %c0_i32 = arith.constant 0 : i32
    %c0_i32_0 = arith.constant 0 : i32
    return %c0_i32, %arg0 : i32, i32
  }
  func.func @transform_4(%arg0: i32, %arg1: memref<4xi32, #tpu.memory_space<smem>>) -> (i32, i32) {
    %c0_i32 = arith.constant 0 : i32
    %c0_i32_0 = arith.constant 0 : i32
    return %c0_i32, %arg0 : i32, i32
  }
  func.func @transform_5(%arg0: i32, %arg1: memref<4xi32, #tpu.memory_space<smem>>) -> (i32, i32) {
    %c0_i32 = arith.constant 0 : i32
    %c0_i32_0 = arith.constant 0 : i32
    %c0_i32_1 = arith.constant 0 : i32
    return %c0_i32, %c0_i32_0 : i32, i32
  }
}

</mosaic_0001>

<llo_original>
// kernel: cbow_forward.1
$region0: #{cbow_forward.1}
  #allocation0 [shape = 'u32[]', space=smem, size = 0x4, offset = 0x4, fixed_abs, tag = 'smem constant byte address 0x4 - core index']
  #allocation1 [shape = 'u32[144,128]{1,0:T(1,128)}', space=vmem, size = 0x12000, scoped, tag = 'internal scratch']
  #allocation2 [shape = 'f32[4,32]{1,0:T(4,128)}', space=vmem, size = 0x800, scoped, tag = 'scratch operand']
  #allocation3 [shape = 's32[4]{0}', space=sflag, size = 0x10, scoped, tag = 'scratch operand']
  #allocation4 [shape = 'bf16[1,128]{1,0:T(2,128)(2,1)}', space=vmem, size = 0x200, scoped, tag = 'scratch operand']
  #allocation5 [shape = 'f32[1,1]{1,0:T(1,128)}', space=vmem, size = 0x200, scoped, tag = 'scratch operand']
  #allocation6 [shape = 'f32[1,1]{1,0:T(1,128)}', space=vmem, size = 0x200, scoped, tag = 'scratch operand']
  #allocation7 [shape = 's32[1]{0}', space=sflag, size = 0x4, scoped, tag = 'scoped memory for cbow_forward.1']
  #allocation8 [shape = 'u8[512]{0}', space=smem, size = 0x200, scoped, tag = 'prefetched SMEM operand 0']
  #allocation10 [shape = 's32[]', space=sflag, size = 0x4, offset = 0, fixed_abs, tag = 'sflag constant byte address 0x0 - dummy sync flag']
  #allocation11 [shape = 's32[]', space=sflag, size = 0x4, offset = 0, fixed_abs, tag = 'sflag constant byte address 0x0 - dummy sync flag']
  #allocation12 [shape = 's32[]', space=sflag, size = 0x4, offset = 0, fixed_abs, tag = 'sflag constant byte address 0x0 - dummy sync flag']
  #allocation13 [shape = 's32[]', space=sflag, size = 0x4, offset = 0, fixed_abs, tag = 'sflag constant byte address 0x0 - dummy sync flag']
  %s0 = inlined_call_operand.vmem [shape: s32[4], index: 0, kind: input, shape index: {}]
  %s1 = inlined_call_operand.vmem [shape: f32[1024,32], index: 1, kind: input, shape index: {}]
  %s2 = inlined_call_operand.vmem [shape: f32[32,128], index: 2, kind: input, shape index: {}]
  %s3 = inlined_call_operand.vmem [shape: f32[1,128], index: 3, kind: input, shape index: {}]
  %s4 = inlined_call_operand.vmem [shape: bf16[128,1024], index: 4, kind: input, shape index: {}]
  %s5 = inlined_call_operand.vmem [shape: f32[1,1024], index: 5, kind: input, shape index: {}]
  %s6 = inlined_call_operand.vmem [shape: f32[4,256], index: 6, kind: output, shape index: {}]
  %s7 = sld [smem:[#allocation0]]
  $region215: #{cbow_forward.1} parent=0
    _
  %s9 = ssub.s32 1, %s7
  %s10 = scalar_select 0, %s9, %s7
  %s11 = sshll.u32 %s0, 4
  %s12 = int_to_ptr.vmem [resolvable:$true] %s11
  %14 = dma.vmem_to_smem %s12, 16, [#allocation8], [#allocation7]
  %15 = dma.done [#allocation7], 16
  %16 = sfence
  $region1: #{cbow_forward.1} parent=0
    #allocation9 [shape = 'u8[131072]{0}', space=vmem, size = 0x20000, scoped, tag = 'input window, operand 4']
    loop: start=0, step=1, limit=6
    $region2: #{cbow_forward.1} parent=1 // loop_pre_header
      _
    $region3: #{cbow_forward.1} parent=1 // loop_header
      %s18 = sphi 0, %s22
      %p19 = scmp.ge.s32.totalorder %s18, 6
      %s26 = sphi 0, %s26
      %s28 = sphi 0, %s26
      %s29 = sphi 0, %s28
      %s43 = sphi 0, %s29
      %s47 = sphi 0, %s47
      %s49 = sphi 0, %s47
      %s50 = sphi 0, %s49
      %s64 = sphi 0, %s50
      %s70 = sphi 0, %s72
      %s73 = sphi 0, %s70
      %s74 = sphi 0, %s73
      %s90 = sphi 0, %s74
      %s96 = sphi 0, %s98
      %s99 = sphi 0, %s96
      %s100 = sphi 0, %s99
      %s116 = sphi 0, %s100
      %s120 = sphi 0, %s120
      %s122 = sphi 0, %s120
      %s123 = sphi 0, %s122
      %s137 = sphi 0, %s123
    $region4: #{cbow_forward.1} parent=1 // loop_header_branch
      %21 = sbr.rel (%p19) target = $region8
    $region5: #{cbow_forward.1} parent=1 // loop_body
      %s23 = ssub.s32 %s18, 1
      %s24 = ssub.s32 %s18, 2
      %s25 = sadd.s32 %s18, 1
      %s27 = sadd.s32 %s26, 1
      %p30 = scmp.eq.s32.totalorder %s18, 3
      %p31 = scmp.ne.s32.totalorder %s26, %s28
      %p32 = scmp.eq.s32.totalorder %s18, 0
      %p33 = por %p31, %p32
      %p34 = scmp.ne.s32.totalorder %s26, %s28
      %p35 = scmp.eq.s32.totalorder %s23, 3
      %p36 = por %p34, %p35
      %p37 = scmp.ne.s32.totalorder %s28, %s29
      %p38 = scmp.eq.s32.totalorder %s23, 0
      %p39 = por %p37, %p38
      %p40 = scmp.ne.s32.totalorder %s28, %s29
      %p41 = scmp.eq.s32.totalorder %s24, 3
      %p42 = por %p40, %p41
      %p44 = scmp.ne.s32.totalorder %s29, %s43
      %p45 = scmp.eq.s32.totalorder %s24, 0
      %p46 = por %p44, %p45
      %s48 = sadd.s32 %s47, 1
      %p51 = scmp.eq.s32.totalorder %s18, 3
      %p52 = scmp.ne.s32.totalorder %s47, %s49
      %p53 = scmp.eq.s32.totalorder %s18, 0
      %p54 = por %p52, %p53
      %p55 = scmp.ne.s32.totalorder %s47, %s49
      %p56 = scmp.eq.s32.totalorder %s23, 3
      %p57 = por %p55, %p56
      %p58 = scmp.ne.s32.totalorder %s49, %s50
      %p59 = scmp.eq.s32.totalorder %s23, 0
      %p60 = por %p58, %p59
      %p61 = scmp.ne.s32.totalorder %s49, %s50
      %p62 = scmp.eq.s32.totalorder %s24, 3
      %p63 = por %p61, %p62
      %p65 = scmp.ne.s32.totalorder %s50, %s64
      %p66 = scmp.eq.s32.totalorder %s24, 0
      %p67 = por %p65, %p66
      %s68 = ssub.s32 %s18, %s25
      %p69 = scmp.eq.s32.totalorder %s68, 0
      %s71 = sadd.s32 %s70, 1
      %s72 = scalar_select %p69, %s70, %s71
      %p75 = pneg %p69
      %p76 = scmp.eq.s32.totalorder %s18, 3
      %p77 = por %p75, %p76
      %p78 = scmp.ne.s32.totalorder %s70, %s73
      %p79 = scmp.eq.s32.totalorder %s18, 0
      %p80 = por %p78, %p79
      %p81 = scmp.ne.s32.totalorder %s70, %s73
      %p82 = scmp.eq.s32.totalorder %s23, 3
      %p83 = por %p81, %p82
      %p84 = scmp.ne.s32.totalorder %s73, %s74
      %p85 = scmp.eq.s32.totalorder %s23, 0
      %p86 = por %p84, %p85
      %p87 = scmp.ne.s32.totalorder %s73, %s74
      %p88 = scmp.eq.s32.totalorder %s24, 3
      %p89 = por %p87, %p88
      %p91 = scmp.ne.s32.totalorder %s74, %s90
      %p92 = scmp.eq.s32.totalorder %s24, 0
      %p93 = por %p91, %p92
      %s94 = ssub.s32 %s18, %s25
      %p95 = scmp.eq.s32.totalorder %s94, 0
      %s97 = sadd.s32 %s96, 1
      %s98 = scalar_select %p95, %s96, %s97
      %p101 = pneg %p95
      %p102 = scmp.eq.s32.totalorder %s18, 3
      %p103 = por %p101, %p102
      %p104 = scmp.ne.s32.totalorder %s96, %s99
      %p105 = scmp.eq.s32.totalorder %s18, 0
      %p106 = por %p104, %p105
      %p107 = scmp.ne.s32.totalorder %s96, %s99
      %p108 = scmp.eq.s32.totalorder %s23, 3
      %p109 = por %p107, %p108
      %p110 = scmp.ne.s32.totalorder %s99, %s100
      %p111 = scmp.eq.s32.totalorder %s23, 0
      %p112 = por %p110, %p111
      %p113 = scmp.ne.s32.totalorder %s99, %s100
      %p114 = scmp.eq.s32.totalorder %s24, 3
      %p115 = por %p113, %p114
      %p117 = scmp.ne.s32.totalorder %s100, %s116
      %p118 = scmp.eq.s32.totalorder %s24, 0
      %p119 = por %p117, %p118
      %s121 = sadd.s32 %s120, 1
      %p124 = scmp.eq.s32.totalorder %s18, 3
      %p125 = scmp.ne.s32.totalorder %s120, %s122
      %p126 = scmp.eq.s32.totalorder %s18, 0
      %p127 = por %p125, %p126
      %p128 = scmp.ne.s32.totalorder %s120, %s122
      %p129 = scmp.eq.s32.totalorder %s23, 3
      %p130 = por %p128, %p129
      %p131 = scmp.ne.s32.totalorder %s122, %s123
      %p132 = scmp.eq.s32.totalorder %s23, 0
      %p133 = por %p131, %p132
      %p134 = scmp.ne.s32.totalorder %s122, %s123
      %p135 = scmp.eq.s32.totalorder %s24, 3
      %p136 = por %p134, %p135
      %p138 = scmp.ne.s32.totalorder %s123, %s137
      %p139 = scmp.eq.s32.totalorder %s24, 0
      %p140 = por %p138, %p139
      %p141 = scmp.le.s32.totalorder 1, %s18
      %p142 = scmp.lt.s32.totalorder %s18, 5
      %p143 = pnand %p141, %p142
      %p144 = pneg %p143
      // Predicated region
      $region9: #{cbow_forward.1} parent=5 // pred_check
        _
      $region10: #{cbow_forward.1} parent=5 // pred_check_branch
        %146 = sbr.rel (%p143) target = $region12
      $region11: #{cbow_forward.1} parent=5 // pred_region
        %s147 = ssub.s32 %s18, 1
        // Predicated region
        $region13: #{cbow_forward.1} parent=11 // pred_check
          %p148 = pneg %p39
        $region14: #{cbow_forward.1} parent=11 // pred_check_branch
          %150 = sbr.rel (%p148) target = $region16
        $region15: #{cbow_forward.1} parent=11 // pred_region
          _
        $region16: #{cbow_forward.1} parent=11 // pred_fallthru
          _
        // Predicated region
        $region17: #{cbow_forward.1} parent=11 // pred_check
          %p151 = pneg %p60
        $region18: #{cbow_forward.1} parent=11 // pred_check_branch
          %153 = sbr.rel (%p151) target = $region20
        $region19: #{cbow_forward.1} parent=11 // pred_region
          _
        $region20: #{cbow_forward.1} parent=11 // pred_fallthru
          _
      $region12: #{cbow_forward.1} parent=5 // pred_fallthru
        _
      %p154 = scmp.lt.s32.totalorder %s18, 4
      // Predicated region
      $region21: #{cbow_forward.1} parent=5 // pred_check
        %p155 = pneg %p154
      $region22: #{cbow_forward.1} parent=5 // pred_check_branch
        %157 = sbr.rel (%p155) target = $region24
      $region23: #{cbow_forward.1} parent=5 // pred_region
        // Predicated region
        $region25: #{cbow_forward.1} parent=23 // pred_check
          %p158 = pneg %p80
        $region26: #{cbow_forward.1} parent=23 // pred_check_branch
          %160 = sbr.rel (%p158) target = $region28
        $region27: #{cbow_forward.1} parent=23 // pred_region
          %s161 = sand.u32 %s70, 1
          %s162 = sand.u32 %s70, 1
          %s163 = smul.addr %s162, 128
          %s164 = scalar_lea.vmem [#allocation9], %s163
          %s165 = smul.u32 2, %s18
          %s166 = smul.addr %s165, 4
          %s167 = scalar_lea.vmem %s4, %s166
          // Predicated region
          $region29: #{cbow_forward.1} parent=27 // pred_check
            _
          $region30: #{cbow_forward.1} parent=27 // pred_check_branch
            %169 = sbr.rel (0) target = $region32
          $region31: #{cbow_forward.1} parent=27 // pred_region
            // Predicated region
            $region33: #{cbow_forward.1} parent=31 // pred_check
              _
            $region34: #{cbow_forward.1} parent=31 // pred_check_branch
              %171 = sbr.rel (0) target = $region36
            $region35: #{cbow_forward.1} parent=31 // pred_region
              // Predicated region
              $region48: #{cbow_forward.1} parent=35 // pred_check
                _
              $region49: #{cbow_forward.1} parent=35 // pred_check_branch
                %216 = sbr.rel (0) target = $region51
              $region50: #{cbow_forward.1} parent=35 // pred_region
                loop: start=0, step=1, limit=1
                $region52: #{cbow_forward.1} parent=50 // loop_pre_header
                  _
                $region53: #{cbow_forward.1} parent=50 // loop_header
                  %s218 = sphi 0, %s222
                  %p219 = scmp.ge.s32.totalorder %s218, 1
                  %s223 = sphi %s167, %s167
                  %s224 = sphi %s164, %s164
                $region54: #{cbow_forward.1} parent=50 // loop_header_branch
                  %221 = sbr.rel (%p219) target = $region58
                $region55: #{cbow_forward.1} parent=50 // loop_body
                  %v225 = vld [vmem:[%s223] sm:$0xff]
                  %226 = vst [vmem:[%s224] sm:$0xff] %v225
                  %v227 = vld [vmem:[%s223 + $0x20] sm:$0xff]
                  %228 = vst [vmem:[%s224 + $0x8] sm:$0xff] %v227
                  %v229 = vld [vmem:[%s223 + $0x40] sm:$0xff]
                  %230 = vst [vmem:[%s224 + $0x10] sm:$0xff] %v229
                  %v231 = vld [vmem:[%s223 + $0x60] sm:$0xff]
                  %232 = vst [vmem:[%s224 + $0x18] sm:$0xff] %v231
                  %v233 = vld [vmem:[%s223 + $0x80] sm:$0xff]
                  %234 = vst [vmem:[%s224 + $0x20] sm:$0xff] %v233
                  %v235 = vld [vmem:[%s223 + $0xa0] sm:$0xff]
                  %236 = vst [vmem:[%s224 + $0x28] sm:$0xff] %v235
                  %v237 = vld [vmem:[%s223 + $0xc0] sm:$0xff]
                  %238 = vst [vmem:[%s224 + $0x30] sm:$0xff] %v237
                  %v239 = vld [vmem:[%s223 + $0xe0] sm:$0xff]
                  %240 = vst [vmem:[%s224 + $0x38] sm:$0xff] %v239
                  %v241 = vld [vmem:[%s223 + $0x100] sm:$0xff]
                  %242 = vst [vmem:[%s224 + $0x40] sm:$0xff] %v241
                  %v243 = vld [vmem:[%s223 + $0x120] sm:$0xff]
                  %244 = vst [vmem:[%s224 + $0x48] sm:$0xff] %v243
                  %v245 = vld [vmem:[%s223 + $0x140] sm:$0xff]
                  %246 = vst [vmem:[%s224 + $0x50] sm:$0xff] %v245
                  %v247 = vld [vmem:[%s223 + $0x160] sm:$0xff]
                  %248 = vst [vmem:[%s224 + $0x58] sm:$0xff] %v247
                  %v249 = vld [vmem:[%s223 + $0x180] sm:$0xff]
                  %250 = vst [vmem:[%s224 + $0x60] sm:$0xff] %v249
                  %v251 = vld [vmem:[%s223 + $0x1a0] sm:$0xff]
                  %252 = vst [vmem:[%s224 + $0x68] sm:$0xff] %v251
                  %v253 = vld [vmem:[%s223 + $0x1c0] sm:$0xff]
                  %254 = vst [vmem:[%s224 + $0x70] sm:$0xff] %v253
                  %v255 = vld [vmem:[%s223 + $0x1e0] sm:$0xff]
                  %256 = vst [vmem:[%s224 + $0x78] sm:$0xff] %v255
                $region56: #{cbow_forward.1} parent=50 // loop_footer
                  %s222 = sadd.s32 1, %s218
                $region57: #{cbow_forward.1} parent=50 // loop_footer_branch
                  %217 = sbr.rel target = $region53
                $region58: #{cbow_forward.1} parent=50 // loop_exit
                  _
              $region51: #{cbow_forward.1} parent=35 // pred_fallthru
                _
              // Predicated region
              $region59: #{cbow_forward.1} parent=35 // pred_check
                _
              $region60: #{cbow_forward.1} parent=35 // pred_check_branch
                %258 = sbr.rel target = $region62
              $region61: #{cbow_forward.1} parent=35 // pred_region
                _
              $region62: #{cbow_forward.1} parent=35 // pred_fallthru
                _
            $region36: #{cbow_forward.1} parent=31 // pred_fallthru
              _
            // Predicated region
            $region37: #{cbow_forward.1} parent=31 // pred_check
              _
            $region38: #{cbow_forward.1} parent=31 // pred_check_branch
              %173 = sbr.rel target = $region40
            $region39: #{cbow_forward.1} parent=31 // pred_region
              loop: start=0, step=1, limit=1
              $region41: #{cbow_forward.1} parent=39 // loop_pre_header
                _
              $region42: #{cbow_forward.1} parent=39 // loop_header
                %s176 = sphi 0, %s180
                %p177 = scmp.ge.s32.totalorder %s176, 1
                %s181 = sphi %s167, %s167
                %s182 = sphi %s164, %s164
              $region43: #{cbow_forward.1} parent=39 // loop_header_branch
                %179 = sbr.rel (%p177) target = $region47
              $region44: #{cbow_forward.1} parent=39 // loop_body
                %v183 = vld [vmem:[%s181] sm:$0xff]
                %184 = vst [vmem:[%s182] sm:$0xff] %v183
                %v185 = vld [vmem:[%s181 + $0x20] sm:$0xff]
                %186 = vst [vmem:[%s182 + $0x8] sm:$0xff] %v185
                %v187 = vld [vmem:[%s181 + $0x40] sm:$0xff]
                %188 = vst [vmem:[%s182 + $0x10] sm:$0xff] %v187
                %v189 = vld [vmem:[%s181 + $0x60] sm:$0xff]
                %190 = vst [vmem:[%s182 + $0x18] sm:$0xff] %v189
                %v191 = vld [vmem:[%s181 + $0x80] sm:$0xff]
                %192 = vst [vmem:[%s182 + $0x20] sm:$0xff] %v191
                %v193 = vld [vmem:[%s181 + $0xa0] sm:$0xff]
                %194 = vst [vmem:[%s182 + $0x28] sm:$0xff] %v193
                %v195 = vld [vmem:[%s181 + $0xc0] sm:$0xff]
                %196 = vst [vmem:[%s182 + $0x30] sm:$0xff] %v195
                %v197 = vld [vmem:[%s181 + $0xe0] sm:$0xff]
                %198 = vst [vmem:[%s182 + $0x38] sm:$0xff] %v197
                %v199 = vld [vmem:[%s181 + $0x100] sm:$0xff]
                %200 = vst [vmem:[%s182 + $0x40] sm:$0xff] %v199
                %v201 = vld [vmem:[%s181 + $0x120] sm:$0xff]
                %202 = vst [vmem:[%s182 + $0x48] sm:$0xff] %v201
                %v203 = vld [vmem:[%s181 + $0x140] sm:$0xff]
                %204 = vst [vmem:[%s182 + $0x50] sm:$0xff] %v203
                %v205 = vld [vmem:[%s181 + $0x160] sm:$0xff]
                %206 = vst [vmem:[%s182 + $0x58] sm:$0xff] %v205
                %v207 = vld [vmem:[%s181 + $0x180] sm:$0xff]
                %208 = vst [vmem:[%s182 + $0x60] sm:$0xff] %v207
                %v209 = vld [vmem:[%s181 + $0x1a0] sm:$0xff]
                %210 = vst [vmem:[%s182 + $0x68] sm:$0xff] %v209
                %v211 = vld [vmem:[%s181 + $0x1c0] sm:$0xff]
                %212 = vst [vmem:[%s182 + $0x70] sm:$0xff] %v211
                %v213 = vld [vmem:[%s181 + $0x1e0] sm:$0xff]
                %214 = vst [vmem:[%s182 + $0x78] sm:$0xff] %v213
              $region45: #{cbow_forward.1} parent=39 // loop_footer
                %s180 = sadd.s32 1, %s176
              $region46: #{cbow_forward.1} parent=39 // loop_footer_branch
                %175 = sbr.rel target = $region42
              $region47: #{cbow_forward.1} parent=39 // loop_exit
                _
            $region40: #{cbow_forward.1} parent=31 // pred_fallthru
              _
          $region32: #{cbow_forward.1} parent=27 // pred_fallthru
            _
          %259 = vnop
        $region28: #{cbow_forward.1} parent=23 // pred_fallthru
          _
        // Predicated region
        $region63: #{cbow_forward.1} parent=23 // pred_check
          %p260 = pneg %p106
        $region64: #{cbow_forward.1} parent=23 // pred_check_branch
          %262 = sbr.rel (%p260) target = $region66
        $region65: #{cbow_forward.1} parent=23 // pred_region
          %s263 = smul.u32 2, %s18
          %p264 = scmp.lt.s32.totalorder %s263, 7
          %s265 = scalar_select %p264, %s263, 7
          %s266 = scalar_lea.vmem %s5, %s265
          %s267 = smul.u32 2, %s18
        $region66: #{cbow_forward.1} parent=23 // pred_fallthru
          _
      $region24: #{cbow_forward.1} parent=5 // pred_fallthru
        _
      %p268 = scmp.le.s32.totalorder 1, %s18
      %p269 = scmp.lt.s32.totalorder %s18, 5
      %p270 = pnand %p268, %p269
      %p271 = pneg %p270
      // Predicated region
      $region67: #{cbow_forward.1} parent=5 // pred_check
        _
      $region68: #{cbow_forward.1} parent=5 // pred_check_branch
        %273 = sbr.rel (%p270) target = $region70
      $region69: #{cbow_forward.1} parent=5 // pred_region
        %s274 = ssub.s32 %s18, 1
        %s275 = sand.u32 %s73, 1
        %s276 = sand.u32 %s73, 1
        %s277 = smul.addr %s276, 128
        %s278 = scalar_lea.vmem [#allocation9], %s277
        // Predicated region
        $region71: #{cbow_forward.1} parent=69 // pred_check
          %p279 = pneg %p86
        $region72: #{cbow_forward.1} parent=69 // pred_check_branch
          %281 = sbr.rel (%p279) target = $region74
        $region73: #{cbow_forward.1} parent=69 // pred_region
          _
        $region74: #{cbow_forward.1} parent=69 // pred_fallthru
          _
        %p282 = pneg %p39
        %p283 = pneg %p36
        %p284 = pneg %p60
        %p285 = pneg %p57
        %s286 = sand.u32 %s73, 1
        %s287 = sand.u32 %s73, 1
        %s288 = smul.addr %s287, 128
        %s289 = scalar_lea.vmem [#allocation9], %s288
        %p290 = pneg %p86
        %p291 = pneg %p83
        %s292 = smul.u32 2, %s23
        %p293 = scmp.lt.s32.totalorder %s292, 7
        %s294 = scalar_select %p293, %s292, 7
        %s295 = scalar_lea.vmem %s5, %s294
        %p296 = pneg %p112
        %p297 = pneg %p109
        %p298 = pneg %p133
        %p299 = pneg %p130
        %s300 = smul.u32 2, %s23
        %s301 = smul.u32 2, %s23
        %p302 = scmp.lt.s32.totalorder %s301, 7
        %s303 = scalar_select %p302, %s301, 7
        %s304 = scalar_lea.vmem %s5, %s303
        %s305 = smul.u32 2, %s23
        %p307 = scmp.eq.s32.totalorder %s23, 0
        // Predicated region
        $region75: #{cbow_forward.1} parent=69 // pred_check
          %p308 = pneg %p307
        $region76: #{cbow_forward.1} parent=69 // pred_check_branch
          %310 = sbr.rel (%p308) target = $region78
        $region77: #{cbow_forward.1} parent=69 // pred_region
          %s311 = sld [smem:[#allocation8]]
          %s312 = sld [smem:[#allocation8 + $0x1]]
          %s313 = sld [smem:[#allocation8 + $0x2]]
          %s314 = sld [smem:[#allocation8 + $0x3]]
          %s315 = scalar_lea.vmem %s1, %s311
          %p317 = scmp.lt.u32.totalorder 1, 8
          %p318 = pneg %p317
          // Predicated region
          $region79: #{cbow_forward.1} parent=77 // pred_check
            _
          $region80: #{cbow_forward.1} parent=77 // pred_check_branch
            %320 = sbr.rel (%p317) target = $region82
          $region81: #{cbow_forward.1} parent=77 // pred_region
            %s335 = sand.u32 1, 7
            %p336 = scmp.eq.s32.totalorder %s335, 0
            %p337 = pneg %p336
            // Predicated region
            $region94: #{cbow_forward.1} parent=81 // pred_check
              _
            $region95: #{cbow_forward.1} parent=81 // pred_check_branch
              %339 = sbr.rel (%p336) target = $region97
            $region96: #{cbow_forward.1} parent=81 // pred_region
              %s340 = sand.u32 1, 7
              %s341 = ssub.s32 1, %s340
              %s342 = scalar_lea.vmem %s315, %s341
              %s343 = ssub.s32 1, %s340
              %s344 = scalar_lea.vmem [#allocation2], %s343
              %s345 = sshllo.u32 0, %s340
              loop: start=0, step=1, limit=1
              $region98: #{cbow_forward.1} parent=96 // loop_pre_header
                _
              $region99: #{cbow_forward.1} parent=96 // loop_header
                %s347 = sphi 0, %s351
                %p348 = scmp.ge.s32.totalorder %s347, 1
                %s352 = sphi %s342, %s342
                %s353 = sphi %s344, %s344
              $region100: #{cbow_forward.1} parent=96 // loop_header_branch
                %350 = sbr.rel (%p348) target = $region104
              $region101: #{cbow_forward.1} parent=96 // loop_body
                %v354 = vld [vmem:[%s352] sm:%s345]
                %355 = vst [vmem:[%s353] sm:%s345] %v354
              $region102: #{cbow_forward.1} parent=96 // loop_footer
                %s351 = sadd.s32 1, %s347
              $region103: #{cbow_forward.1} parent=96 // loop_footer_branch
                %346 = sbr.rel target = $region99
              $region104: #{cbow_forward.1} parent=96 // loop_exit
                _
            $region97: #{cbow_forward.1} parent=81 // pred_fallthru
              _
          $region82: #{cbow_forward.1} parent=77 // pred_fallthru
            _
          // Predicated region
          $region83: #{cbow_forward.1} parent=77 // pred_check
            %p321 = pneg %p317
          $region84: #{cbow_forward.1} parent=77 // pred_check_branch
            %323 = sbr.rel (%p321) target = $region86
          $region85: #{cbow_forward.1} parent=77 // pred_region
            %s324 = sshllo.u32 0, 1
            loop: start=0, step=1, limit=1
            $region87: #{cbow_forward.1} parent=85 // loop_pre_header
              _
            $region88: #{cbow_forward.1} parent=85 // loop_header
              %s326 = sphi 0, %s330
              %p327 = scmp.ge.s32.totalorder %s326, 1
              %s331 = sphi %s315, %s315
              %s332 = sphi [#allocation2], [#allocation2]
            $region89: #{cbow_forward.1} parent=85 // loop_header_branch
              %329 = sbr.rel (%p327) target = $region93
            $region90: #{cbow_forward.1} parent=85 // loop_body
              %v333 = vld [vmem:[%s331] sm:%s324]
              %334 = vst [vmem:[%s332] sm:%s324] %v333
            $region91: #{cbow_forward.1} parent=85 // loop_footer
              %s330 = sadd.s32 1, %s326
            $region92: #{cbow_forward.1} parent=85 // loop_footer_branch
              %325 = sbr.rel target = $region88
            $region93: #{cbow_forward.1} parent=85 // loop_exit
              _
          $region86: #{cbow_forward.1} parent=77 // pred_fallthru
            _
          // Predicated region
          $region105: #{cbow_forward.1} parent=77 // pred_check
            _
          $region106: #{cbow_forward.1} parent=77 // pred_check_branch
            %358 = sbr.rel (0) target = $region108
          $region107: #{cbow_forward.1} parent=77 // pred_region
            %359 = vsyncadd [#allocation3], 16
          $region108: #{cbow_forward.1} parent=77 // pred_fallthru
            _
          %s360 = scalar_lea.vmem %s1, %s312
          %s361 = scalar_lea.vmem [#allocation2], 1
          %s362 = scalar_lea.sflag [#allocation3], 1
          %p364 = scmp.lt.u32.totalorder 1, 8
          %p365 = pneg %p364
          // Predicated region
          $region109: #{cbow_forward.1} parent=77 // pred_check
            _
          $region110: #{cbow_forward.1} parent=77 // pred_check_branch
            %367 = sbr.rel (%p364) target = $region112
          $region111: #{cbow_forward.1} parent=77 // pred_region
            %s382 = sand.u32 1, 7
            %p383 = scmp.eq.s32.totalorder %s382, 0
            %p384 = pneg %p383
            // Predicated region
            $region124: #{cbow_forward.1} parent=111 // pred_check
              _
            $region125: #{cbow_forward.1} parent=111 // pred_check_branch
              %386 = sbr.rel (%p383) target = $region127
            $region126: #{cbow_forward.1} parent=111 // pred_region
              %s387 = sand.u32 1, 7
              %s388 = ssub.s32 1, %s387
              %s389 = scalar_lea.vmem %s360, %s388
              %s390 = ssub.s32 1, %s387
              %s391 = scalar_lea.vmem %s361, %s390 [#allocation2]
              %s392 = sshllo.u32 0, %s387
              loop: start=0, step=1, limit=1
              $region128: #{cbow_forward.1} parent=126 // loop_pre_header
                _
              $region129: #{cbow_forward.1} parent=126 // loop_header
                %s394 = sphi 0, %s398
                %p395 = scmp.ge.s32.totalorder %s394, 1
                %s399 = sphi %s389, %s389
                %s400 = sphi %s391, %s391
              $region130: #{cbow_forward.1} parent=126 // loop_header_branch
                %397 = sbr.rel (%p395) target = $region134
              $region131: #{cbow_forward.1} parent=126 // loop_body
                %v401 = vld [vmem:[%s399] sm:%s392]
                %402 = vst [vmem:[%s400] sm:%s392] %v401
              $region132: #{cbow_forward.1} parent=126 // loop_footer
                %s398 = sadd.s32 1, %s394
              $region133: #{cbow_forward.1} parent=126 // loop_footer_branch
                %393 = sbr.rel target = $region129
              $region134: #{cbow_forward.1} parent=126 // loop_exit
                _
            $region127: #{cbow_forward.1} parent=111 // pred_fallthru
              _
          $region112: #{cbow_forward.1} parent=77 // pred_fallthru
            _
          // Predicated region
          $region113: #{cbow_forward.1} parent=77 // pred_check
            %p368 = pneg %p364
          $region114: #{cbow_forward.1} parent=77 // pred_check_branch
            %370 = sbr.rel (%p368) target = $region116
          $region115: #{cbow_forward.1} parent=77 // pred_region
            %s371 = sshllo.u32 0, 1
            loop: start=0, step=1, limit=1
            $region117: #{cbow_forward.1} parent=115 // loop_pre_header
              _
            $region118: #{cbow_forward.1} parent=115 // loop_header
              %s373 = sphi 0, %s377
              %p374 = scmp.ge.s32.totalorder %s373, 1
              %s378 = sphi %s360, %s360
              %s379 = sphi %s361, %s361
            $region119: #{cbow_forward.1} parent=115 // loop_header_branch
              %376 = sbr.rel (%p374) target = $region123
            $region120: #{cbow_forward.1} parent=115 // loop_body
              %v380 = vld [vmem:[%s378] sm:%s371]
              %381 = vst [vmem:[%s379] sm:%s371] %v380
            $region121: #{cbow_forward.1} parent=115 // loop_footer
              %s377 = sadd.s32 1, %s373
            $region122: #{cbow_forward.1} parent=115 // loop_footer_branch
              %372 = sbr.rel target = $region118
            $region123: #{cbow_forward.1} parent=115 // loop_exit
              _
          $region116: #{cbow_forward.1} parent=77 // pred_fallthru
            _
          // Predicated region
          $region135: #{cbow_forward.1} parent=77 // pred_check
            _
          $region136: #{cbow_forward.1} parent=77 // pred_check_branch
            %405 = sbr.rel (0) target = $region138
          $region137: #{cbow_forward.1} parent=77 // pred_region
            %406 = vsyncadd %s362, 16
          $region138: #{cbow_forward.1} parent=77 // pred_fallthru
            _
          %s407 = scalar_lea.vmem %s1, %s313
          %s408 = scalar_lea.vmem [#allocation2], 2
          %s409 = scalar_lea.sflag [#allocation3], 2
          %p411 = scmp.lt.u32.totalorder 1, 8
          %p412 = pneg %p411
          // Predicated region
          $region139: #{cbow_forward.1} parent=77 // pred_check
            _
          $region140: #{cbow_forward.1} parent=77 // pred_check_branch
            %414 = sbr.rel (%p411) target = $region142
          $region141: #{cbow_forward.1} parent=77 // pred_region
            %s429 = sand.u32 1, 7
            %p430 = scmp.eq.s32.totalorder %s429, 0
            %p431 = pneg %p430
            // Predicated region
            $region154: #{cbow_forward.1} parent=141 // pred_check
              _
            $region155: #{cbow_forward.1} parent=141 // pred_check_branch
              %433 = sbr.rel (%p430) target = $region157
            $region156: #{cbow_forward.1} parent=141 // pred_region
              %s434 = sand.u32 1, 7
              %s435 = ssub.s32 1, %s434
              %s436 = scalar_lea.vmem %s407, %s435
              %s437 = ssub.s32 1, %s434
              %s438 = scalar_lea.vmem %s408, %s437 [#allocation2]
              %s439 = sshllo.u32 0, %s434
              loop: start=0, step=1, limit=1
              $region158: #{cbow_forward.1} parent=156 // loop_pre_header
                _
              $region159: #{cbow_forward.1} parent=156 // loop_header
                %s441 = sphi 0, %s445
                %p442 = scmp.ge.s32.totalorder %s441, 1
                %s446 = sphi %s436, %s436
                %s447 = sphi %s438, %s438
              $region160: #{cbow_forward.1} parent=156 // loop_header_branch
                %444 = sbr.rel (%p442) target = $region164
              $region161: #{cbow_forward.1} parent=156 // loop_body
                %v448 = vld [vmem:[%s446] sm:%s439]
                %449 = vst [vmem:[%s447] sm:%s439] %v448
              $region162: #{cbow_forward.1} parent=156 // loop_footer
                %s445 = sadd.s32 1, %s441
              $region163: #{cbow_forward.1} parent=156 // loop_footer_branch
                %440 = sbr.rel target = $region159
              $region164: #{cbow_forward.1} parent=156 // loop_exit
                _
            $region157: #{cbow_forward.1} parent=141 // pred_fallthru
              _
          $region142: #{cbow_forward.1} parent=77 // pred_fallthru
            _
          // Predicated region
          $region143: #{cbow_forward.1} parent=77 // pred_check
            %p415 = pneg %p411
          $region144: #{cbow_forward.1} parent=77 // pred_check_branch
            %417 = sbr.rel (%p415) target = $region146
          $region145: #{cbow_forward.1} parent=77 // pred_region
            %s418 = sshllo.u32 0, 1
            loop: start=0, step=1, limit=1
            $region147: #{cbow_forward.1} parent=145 // loop_pre_header
              _
            $region148: #{cbow_forward.1} parent=145 // loop_header
              %s420 = sphi 0, %s424
              %p421 = scmp.ge.s32.totalorder %s420, 1
              %s425 = sphi %s407, %s407
              %s426 = sphi %s408, %s408
            $region149: #{cbow_forward.1} parent=145 // loop_header_branch
              %423 = sbr.rel (%p421) target = $region153
            $region150: #{cbow_forward.1} parent=145 // loop_body
              %v427 = vld [vmem:[%s425] sm:%s418]
              %428 = vst [vmem:[%s426] sm:%s418] %v427
            $region151: #{cbow_forward.1} parent=145 // loop_footer
              %s424 = sadd.s32 1, %s420
            $region152: #{cbow_forward.1} parent=145 // loop_footer_branch
              %419 = sbr.rel target = $region148
            $region153: #{cbow_forward.1} parent=145 // loop_exit
              _
          $region146: #{cbow_forward.1} parent=77 // pred_fallthru
            _
          // Predicated region
          $region165: #{cbow_forward.1} parent=77 // pred_check
            _
          $region166: #{cbow_forward.1} parent=77 // pred_check_branch
            %452 = sbr.rel (0) target = $region168
          $region167: #{cbow_forward.1} parent=77 // pred_region
            %453 = vsyncadd %s409, 16
          $region168: #{cbow_forward.1} parent=77 // pred_fallthru
            _
          %s454 = scalar_lea.vmem %s1, %s314
          %s455 = scalar_lea.vmem [#allocation2], 3
          %s456 = scalar_lea.sflag [#allocation3], 3
          %p458 = scmp.lt.u32.totalorder 1, 8
          %p459 = pneg %p458
          // Predicated region
          $region169: #{cbow_forward.1} parent=77 // pred_check
            _
          $region170: #{cbow_forward.1} parent=77 // pred_check_branch
            %461 = sbr.rel (%p458) target = $region172
          $region171: #{cbow_forward.1} parent=77 // pred_region
            %s476 = sand.u32 1, 7
            %p477 = scmp.eq.s32.totalorder %s476, 0
            %p478 = pneg %p477
            // Predicated region
            $region184: #{cbow_forward.1} parent=171 // pred_check
              _
            $region185: #{cbow_forward.1} parent=171 // pred_check_branch
              %480 = sbr.rel (%p477) target = $region187
            $region186: #{cbow_forward.1} parent=171 // pred_region
              %s481 = sand.u32 1, 7
              %s482 = ssub.s32 1, %s481
              %s483 = scalar_lea.vmem %s454, %s482
              %s484 = ssub.s32 1, %s481
              %s485 = scalar_lea.vmem %s455, %s484 [#allocation2]
              %s486 = sshllo.u32 0, %s481
              loop: start=0, step=1, limit=1
              $region188: #{cbow_forward.1} parent=186 // loop_pre_header
                _
              $region189: #{cbow_forward.1} parent=186 // loop_header
                %s488 = sphi 0, %s492
                %p489 = scmp.ge.s32.totalorder %s488, 1
                %s493 = sphi %s483, %s483
                %s494 = sphi %s485, %s485
              $region190: #{cbow_forward.1} parent=186 // loop_header_branch
                %491 = sbr.rel (%p489) target = $region194
              $region191: #{cbow_forward.1} parent=186 // loop_body
                %v495 = vld [vmem:[%s493] sm:%s486]
                %496 = vst [vmem:[%s494] sm:%s486] %v495
              $region192: #{cbow_forward.1} parent=186 // loop_footer
                %s492 = sadd.s32 1, %s488
              $region193: #{cbow_forward.1} parent=186 // loop_footer_branch
                %487 = sbr.rel target = $region189
              $region194: #{cbow_forward.1} parent=186 // loop_exit
                _
            $region187: #{cbow_forward.1} parent=171 // pred_fallthru
              _
          $region172: #{cbow_forward.1} parent=77 // pred_fallthru
            _
          // Predicated region
          $region173: #{cbow_forward.1} parent=77 // pred_check
            %p462 = pneg %p458
          $region174: #{cbow_forward.1} parent=77 // pred_check_branch
            %464 = sbr.rel (%p462) target = $region176
          $region175: #{cbow_forward.1} parent=77 // pred_region
            %s465 = sshllo.u32 0, 1
            loop: start=0, step=1, limit=1
            $region177: #{cbow_forward.1} parent=175 // loop_pre_header
              _
            $region178: #{cbow_forward.1} parent=175 // loop_header
              %s467 = sphi 0, %s471
              %p468 = scmp.ge.s32.totalorder %s467, 1
              %s472 = sphi %s454, %s454
              %s473 = sphi %s455, %s455
            $region179: #{cbow_forward.1} parent=175 // loop_header_branch
              %470 = sbr.rel (%p468) target = $region183
            $region180: #{cbow_forward.1} parent=175 // loop_body
              %v474 = vld [vmem:[%s472] sm:%s465]
              %475 = vst [vmem:[%s473] sm:%s465] %v474
            $region181: #{cbow_forward.1} parent=175 // loop_footer
              %s471 = sadd.s32 1, %s467
            $region182: #{cbow_forward.1} parent=175 // loop_footer_branch
              %466 = sbr.rel target = $region178
            $region183: #{cbow_forward.1} parent=175 // loop_exit
              _
          $region176: #{cbow_forward.1} parent=77 // pred_fallthru
            _
          // Predicated region
          $region195: #{cbow_forward.1} parent=77 // pred_check
            _
          $region196: #{cbow_forward.1} parent=77 // pred_check_branch
            %499 = sbr.rel (0) target = $region198
          $region197: #{cbow_forward.1} parent=77 // pred_region
            %500 = vsyncadd %s456, 16
          $region198: #{cbow_forward.1} parent=77 // pred_fallthru
            _
          %s501 = smul.u32 1, 1
          %s502 = sshll.u32 %s501, 4
          %503 = dma.done [#allocation3], %s502
          %s504 = sshll.u32 %s501, 4
          %505 = dma.done %s362, %s504
          %s506 = sshll.u32 %s501, 4
          %507 = dma.done %s409, %s506
          %s508 = sshll.u32 %s501, 4
          %509 = dma.done %s456, %s508
          %v510 = vld [vmem:[#allocation2] sm:$0xf]
          %vm511 = vcmask 257024
          %v512 = vsel %vm511, %v510, 0.0
          %v513 = vrot.slane %v512, 4
          %v514 = vadd.f32 %v512, %v513
          %v515 = vrot.slane %v514, 2
          %v516 = vadd.f32 %v514, %v515
          %v517 = vrot.slane %v516, 1
          %v518 = vadd.f32 %v516, %v517
          %v519 = vld [vmem:[%s2] sm:$0xff]
          %v520 = vld [vmem:[%s2 + $0x8] sm:$0xff]
          %v521 = vld [vmem:[%s2 + $0x10] sm:$0xff]
          %v522 = vld [vmem:[%s2 + $0x18] sm:$0xff]
          %v523 = vld [vmem:[%s3] sm:$0x1]
          %vm524 = vcmask 261120
          %v526 = vsel %vm524, %v518, 0
          %528 = vmatprep.subr.mxu0 0.0
          %529 = vmatpush1.msra.mxu0 %v519
          %530 = vmatprep.subr.mxu0 0.0
          %531 = vmatpush1.msra.mxu0 %v520
          %532 = vmatprep.subr.mxu0 0.0
          %533 = vmatpush1.msra.mxu0 %v521
          %534 = vmatprep.subr.mxu0 0.0
          %535 = vmatpush1.msra.mxu0 %v522
          %536 = vmatprep.subr.mxu0 0.0
          %537 = vmatpush1.msra.mxu0 0.0
          %538 = vmatprep.subr.mxu0 0.0
          %539 = vmatpush1.msra.mxu0 0.0
          %540 = vmatprep.subr.mxu0 0.0
          %541 = vmatpush1.msra.mxu0 0.0
          %542 = vmatprep.subr.mxu0 0.0
          %543 = vmatpush1.msra.mxu0 0.0
          %544 = vmatprep.subr.mxu0 0.0
          %545 = vmatpush1.msra.mxu0 0.0
          %546 = vmatprep.subr.mxu0 0.0
          %547 = vmatpush1.msra.mxu0 0.0
          %548 = vmatprep.subr.mxu0 0.0
          %549 = vmatpush1.msra.mxu0 0.0
          %550 = vmatprep.subr.mxu0 0.0
          %551 = vmatpush1.msra.mxu0 0.0
          %552 = vmatprep.subr.mxu0 0.0
          %553 = vmatpush1.msra.mxu0 0.0
          %554 = vmatprep.subr.mxu0 0.0
          %555 = vmatpush1.msra.mxu0 0.0
          %556 = vmatprep.subr.mxu0 0.0
          %557 = vmatpush1.msra.mxu0 0.0
          %558 = vmatprep.subr.mxu0 0.0
          %559 = vmatpush1.msra.mxu0 0.0
          %560 = vmatprep.subr.mxu0 0.0
          %561 = vmatpush1.msra.mxu0 0.0
          %562 = vmatprep.subr.mxu0 0.0
          %563 = vmatpush1.msra.mxu0 0.0
          %564 = vmatprep.subr.mxu0 0.0
          %565 = vmatpush1.msra.mxu0 0.0
          %566 = vmatprep.subr.mxu0 0.0
          %567 = vmatpush1.msra.mxu0 0.0
          %568 = vmatprep.subr.mxu0 0.0
          %569 = vmatpush1.msra.mxu0 0.0
          %570 = vmatprep.subr.mxu0 0.0
          %571 = vmatpush1.msra.mxu0 0.0
          %572 = vmatprep.subr.mxu0 0.0
          %573 = vmatpush1.msra.mxu0 0.0
          %574 = vmatprep.subr.mxu0 0.0
          %575 = vmatpush1.msra.mxu0 0.0
          %576 = vmatprep.subr.mxu0 0.0
          %577 = vmatpush1.msra.mxu0 0.0
          %578 = vmatprep.subr.mxu0 0.0
          %579 = vmatpush1.msra.mxu0 0.0
          %580 = vmatprep.subr.mxu0 0.0
          %581 = vmatpush1.msra.mxu0 0.0
          %582 = vmatprep.subr.mxu0 0.0
          %583 = vmatpush1.msra.mxu0 0.0
          %584 = vmatprep.subr.mxu0 0.0
          %585 = vmatpush1.msra.mxu0 0.0
          %586 = vmatprep.subr.mxu0 0.0
          %587 = vmatpush1.msra.mxu0 0.0
          %588 = vmatprep.subr.mxu0 0.0
          %589 = vmatpush1.msra.mxu0 0.0
          %590 = vmatprep.subr.mxu0 0.0
          %591 = vmatpush1.msra.mxu0 0.0
          %592 = vmatprep.mubr.f32.mxu0 0.0
          %593 = vmatmul.mubr.f32.gmra.mrb[0].mxu0 %v526
          %v594 = vpop.f32.mrb[0].mxu0
          %v595 = vadd.f32 %v523, %v594
          %v596 = vpop.f32.mrb[0].mxu0
          %597 = vdwg.mxu0
          %v598 = vmax.f32 %v595, 0.0
          %v599 = vpack.c.bf16 %v598, %v598
          %vm600 = vcmask 1040384
          %vm601 = vsmask.f32 256
          %vm602 = vmand %vm600, %vm601
          %v603 = vld [vmem:[#allocation4] sm:$0x1]
          %v604 = vsel %vm602, %v599, %v603
          %605 = vst [vmem:[#allocation4] sm:$0x1] %v604
          %vm606 = vcmask 0
          %607 = vst.msk [vmem:[#allocation5] sm:$0x1] %vm606, -inf
          %608 = vst.msk [vmem:[#allocation6] sm:$0x1] %vm606, 0.0
        $region78: #{cbow_forward.1} parent=69 // pred_fallthru
          _
        %v609 = vld [vmem:[#allocation4] sm:$0x1]
        %v610 = vld [vmem:[%s278] sm:$0xff]
        %v611 = vld [vmem:[%s278 + $0x8] sm:$0xff]
        %v612 = vld [vmem:[%s278 + $0x10] sm:$0xff]
        %v613 = vld [vmem:[%s278 + $0x18] sm:$0xff]
        %v614 = vld [vmem:[%s278 + $0x20] sm:$0xff]
        %v615 = vld [vmem:[%s278 + $0x28] sm:$0xff]
        %v616 = vld [vmem:[%s278 + $0x30] sm:$0xff]
        %v617 = vld [vmem:[%s278 + $0x38] sm:$0xff]
        %v618 = vld [vmem:[%s278 + $0x40] sm:$0xff]
        %v619 = vld [vmem:[%s278 + $0x48] sm:$0xff]
        %v620 = vld [vmem:[%s278 + $0x50] sm:$0xff]
        %v621 = vld [vmem:[%s278 + $0x58] sm:$0xff]
        %v622 = vld [vmem:[%s278 + $0x60] sm:$0xff]
        %v623 = vld [vmem:[%s278 + $0x68] sm:$0xff]
        %v624 = vld [vmem:[%s278 + $0x70] sm:$0xff]
        %v625 = vld [vmem:[%s278 + $0x78] sm:$0xff]
        %v626 = vld [vmem:[%s304] sm:$0x3]
        %v643 = vunpack.c.l.b16 %v610
        %v644 = vunpack.c.h.b16 %v610
        %v645 = vunpack.c.l.b16 %v611
        %v646 = vunpack.c.h.b16 %v611
        %v647 = vunpack.c.l.b16 %v612
        %v648 = vunpack.c.h.b16 %v612
        %v649 = vunpack.c.l.b16 %v613
        %v650 = vunpack.c.h.b16 %v613
        %v651 = vunpack.c.l.b16 %v614
        %v652 = vunpack.c.h.b16 %v614
        %v653 = vunpack.c.l.b16 %v615
        %v654 = vunpack.c.h.b16 %v615
        %v655 = vunpack.c.l.b16 %v616
        %v656 = vunpack.c.h.b16 %v616
        %v657 = vunpack.c.l.b16 %v617
        %v658 = vunpack.c.h.b16 %v617
        %v659 = vunpack.c.l.b16 %v618
        %v660 = vunpack.c.h.b16 %v618
        %v661 = vunpack.c.l.b16 %v619
        %v662 = vunpack.c.h.b16 %v619
        %v663 = vunpack.c.l.b16 %v620
        %v664 = vunpack.c.h.b16 %v620
        %v665 = vunpack.c.l.b16 %v621
        %v666 = vunpack.c.h.b16 %v621
        %v667 = vunpack.c.l.b16 %v622
        %v668 = vunpack.c.h.b16 %v622
        %v669 = vunpack.c.l.b16 %v623
        %v670 = vunpack.c.h.b16 %v623
        %v671 = vunpack.c.l.b16 %v624
        %v672 = vunpack.c.h.b16 %v624
        %v673 = vunpack.c.l.b16 %v625
        %v674 = vunpack.c.h.b16 %v625
        %v675 = vpack.c.b16 %v645, %v643
        %v676 = vpack.c.b16 %v646, %v644
        %v677 = vpack.c.b16 %v649, %v647
        %v678 = vpack.c.b16 %v650, %v648
        %v679 = vpack.c.b16 %v653, %v651
        %v680 = vpack.c.b16 %v654, %v652
        %v681 = vpack.c.b16 %v657, %v655
        %v682 = vpack.c.b16 %v658, %v656
        %v683 = vpack.c.b16 %v661, %v659
        %v684 = vpack.c.b16 %v662, %v660
        %v685 = vpack.c.b16 %v665, %v663
        %v686 = vpack.c.b16 %v666, %v664
        %v687 = vpack.c.b16 %v669, %v667
        %v688 = vpack.c.b16 %v670, %v668
        %v689 = vpack.c.b16 %v673, %v671
        %v690 = vpack.c.b16 %v674, %v672
        %v708 = vlaneseq
        %v709 = vshrl.u32 %v708, 7
        %v710 = vsub.s32 0, %v709
        %v711 = vrot.slane %v626, %v710
        %v712 = vlaneseq
        %v713 = vshrl.u32 %v712, 7
        %v714 = vsub.s32 1, %v713
        %v715 = vrot.slane %v626, %v714
        %718 = vmatprep.subr.bf16.mxu0 %v676
        %719 = vmatpush1.bf16.msra.mxu0 %v675
        %720 = vmatprep.subr.bf16.mxu0 %v678
        %721 = vmatpush1.bf16.msra.mxu0 %v677
        %722 = vmatprep.subr.bf16.mxu0 %v680
        %723 = vmatpush1.bf16.msra.mxu0 %v679
        %724 = vmatprep.subr.bf16.mxu0 %v682
        %725 = vmatpush1.bf16.msra.mxu0 %v681
        %726 = vmatprep.subr.bf16.mxu0 %v684
        %727 = vmatpush1.bf16.msra.mxu0 %v683
        %728 = vmatprep.subr.bf16.mxu0 %v686
        %729 = vmatpush1.bf16.msra.mxu0 %v685
        %730 = vmatprep.subr.bf16.mxu0 %v688
        %731 = vmatpush1.bf16.msra.mxu0 %v687
        %732 = vmatprep.subr.bf16.mxu0 %v690
        %733 = vmatpush1.bf16.msra.mxu0 %v689
        %734 = vmatprep.subr.bf16.mxu0 0
        %735 = vmatpush1.bf16.msra.mxu0 0
        %736 = vmatprep.subr.bf16.mxu0 0
        %737 = vmatpush1.bf16.msra.mxu0 0
        %738 = vmatprep.subr.bf16.mxu0 0
        %739 = vmatpush1.bf16.msra.mxu0 0
        %740 = vmatprep.subr.bf16.mxu0 0
        %741 = vmatpush1.bf16.msra.mxu0 0
        %742 = vmatprep.subr.bf16.mxu0 0
        %743 = vmatpush1.bf16.msra.mxu0 0
        %744 = vmatprep.subr.bf16.mxu0 0
        %745 = vmatpush1.bf16.msra.mxu0 0
        %746 = vmatprep.subr.bf16.mxu0 0
        %747 = vmatpush1.bf16.msra.mxu0 0
        %748 = vmatprep.subr.bf16.mxu0 0
        %749 = vmatpush1.bf16.msra.mxu0 0
        %750 = vmatprep.mubr.bf16.mxu0 0
        %751 = vmatmul.mubr.bf16.gmra.mrb[0].mxu0 %v609
        %v752 = vpop.f32.mrb[0].mxu0
        %v753 = vadd.f32 %v711, %v752
        %v754 = vpop.f32.mrb[0].mxu0
        %v755 = vadd.f32 %v715, %v754
        %v756 = vpop.f32.mrb[0].mxu0
        %v757 = vpop.f32.mrb[0].mxu0
        %758 = vdwg.mxu0
        %v761 = vcombine.low %v753, %v755
        %v763 = vunpack.c.l.s4 1966171168
        %v764 = vunpack.c.0.s8 %v763
        %v765 = vlaneseq
        %v766 = vshrl.u32 %v765, 7
        %v767 = vsub.s32 %v764, %v766
        %v768 = vrot.slane %v761, %v767
        %v770 = vunpack.c.l.s4 1966171168
        %v771 = vunpack.c.0.s8 %v770
        %v772 = vlaneseq
        %v773 = vshrl.u32 %v772, 7
        %v774 = vsub.s32 %v771, %v773
        %v775 = vrot.slane %v768, %v774
        %v777 = vlaneseq
        %vm778 = vcmp.ge.s32.totalorder %v777, 0
        %vm779 = vcmp.lt.s32.totalorder %v777, 256
        %vm780 = vmand %vm778, %vm779
        %s781 = sshra.s32 %s23, 2
        %s782 = sand.u32 %s23, 3
        %s783 = sshra.s32 %s23, 2
        %s784 = sand.u32 %s23, 3
        %s785 = smul.u32 %s781, 2
        %s786 = smul.u32 %s785, 4
        %s787 = sadd.s32 %s786, %s784
        %s788 = scalar_lea.vmem %s6, %s787
        %789 = vst.msk [vmem:[%s788] ss:$4 sm:$0x3] %vm780, %v775
        %vm790 = vcmask 1040384
        %v791 = vsel %vm790, %v753, -inf
        %v792 = vsel %vm790, %v755, -inf
        %v793 = vmax.f32 %v791, %v792
        %794 = vmax.xlane.f32.xlu0 %v793
        %v795 = vpop.xlane.xlu0 %794
        %v796 = vrot.slane %v795, 4
        %v797 = vmax.f32 %v795, %v796
        %v798 = vrot.slane %v797, 2
        %v799 = vmax.f32 %v797, %v798
        %v800 = vrot.slane %v799, 1
        %v801 = vmax.f32 %v799, %v800
        %s802 = vtos %v801
        %v803 = vstv %s802
        %v804 = vld [vmem:[#allocation5] sm:$0x1]
        %v805 = vmax.f32 %v804, %v803
        %v806 = vld [vmem:[#allocation6] sm:$0x1]
        %v807 = vsub.f32 %v804, %v805
        %v808 = vmul.f32 %v807, 1.442695
        %v809 = vpow.pop %v808
        %v810 = vmul.f32 %v806, %v809
        %812 = vset.pattern.permute.xlu0 0
        %813 = vperm.xlu0 %812, %v805
        %v814 = vpop.permute.xlu0 %813
        %v816 = vlaneseq
        %v817 = vshrl.u32 %v816, 7
        %v818 = vsub.s32 0, %v817
        %v819 = vrot.slane %v814, %v818
        %v820 = vsub.f32 %v753, %v819
        %v821 = vsub.f32 %v755, %v819
        %v822 = vmul.f32 %v820, 1.442695
        %v823 = vpow.pop %v822
        %v824 = vmul.f32 %v821, 1.442695
        %v825 = vpow.pop %v824
        %v826 = vsel %vm790, %v823, 0.0
        %v827 = vsel %vm790, %v825, 0.0
        %v828 = vadd.f32 %v826, %v827
        %829 = vadd.xlane.f32.xlu0 %v828
        %v830 = vpop.xlane.xlu0 %829
        %v831 = vrot.slane %v830, 4
        %v832 = vadd.f32 %v830, %v831
        %v833 = vrot.slane %v832, 2
        %v834 = vadd.f32 %v832, %v833
        %v835 = vrot.slane %v834, 1
        %v836 = vadd.f32 %v834, %v835
        %s837 = vtos %v836
        %v838 = vstv %s837
        %v839 = vadd.f32 %v810, %v838
        %vm840 = vcmask 0
        %841 = vst.msk [vmem:[#allocation6] sm:$0x1] %vm840, %v839
        %842 = vst.msk [vmem:[#allocation5] sm:$0x1] %vm840, %v805
        %p843 = scmp.eq.s32.totalorder %s23, 3
        // Predicated region
        $region199: #{cbow_forward.1} parent=69 // pred_check
          %p844 = pneg %p843
        $region200: #{cbow_forward.1} parent=69 // pred_check_branch
          %846 = sbr.rel (%p844) target = $region202
        $region201: #{cbow_forward.1} parent=69 // pred_region
          %v847 = vld [vmem:[#allocation5] sm:$0x1]
          %v848 = vld [vmem:[#allocation6] sm:$0x1]
          %v849 = vlog2.pop %v848
          %v850 = vmul.f32 %v849, 0.6931472
          %v851 = vadd.f32 %v847, %v850
          %v852 = vld [vmem:[%s6] sm:$0xff]
          %v854 = vlaneseq
          %v855 = vshrl.u32 %v854, 7
          %v856 = vsub.s32 0, %v855
          %v857 = vrot.slane %v851, %v856
          %858 = vset.pattern.permute.xlu0 0
          %859 = vperm.xlu0 %858, %v857
          %v860 = vpop.permute.xlu0 %859
          %v862 = vsub.f32 %v852, %v860
          %863 = vst [vmem:[%s6] sm:$0xff] %v862
        $region202: #{cbow_forward.1} parent=69 // pred_fallthru
          _
        // Predicated region
        $region203: #{cbow_forward.1} parent=69 // pred_check
          %p864 = pneg %p130
        $region204: #{cbow_forward.1} parent=69 // pred_check_branch
          %866 = sbr.rel (%p864) target = $region206
        $region205: #{cbow_forward.1} parent=69 // pred_region
          _
        $region206: #{cbow_forward.1} parent=69 // pred_fallthru
          _
        // Predicated region
        $region207: #{cbow_forward.1} parent=69 // pred_check
          %p867 = pneg %p130
        $region208: #{cbow_forward.1} parent=69 // pred_check_branch
          %869 = sbr.rel (%p867) target = $region210
        $region209: #{cbow_forward.1} parent=69 // pred_region
          _
        $region210: #{cbow_forward.1} parent=69 // pred_fallthru
          _
      $region70: #{cbow_forward.1} parent=5 // pred_fallthru
        _
      %p870 = scmp.le.s32.totalorder 2, %s18
      // Predicated region
      $region211: #{cbow_forward.1} parent=5 // pred_check
        %p871 = pneg %p870
      $region212: #{cbow_forward.1} parent=5 // pred_check_branch
        %873 = sbr.rel (%p871) target = $region214
      $region213: #{cbow_forward.1} parent=5 // pred_region
        %s874 = ssub.s32 %s18, 2
      $region214: #{cbow_forward.1} parent=5 // pred_fallthru
        _
    $region6: #{cbow_forward.1} parent=1 // loop_footer
      %s22 = sadd.s32 1, %s18
    $region7: #{cbow_forward.1} parent=1 // loop_footer_branch
      %17 = sbr.rel target = $region3
    $region8: #{cbow_forward.1} parent=1 // loop_exit
      _
  %875 = vsyncmov [#allocation3]
  %s876 = vpop.sfrf %875
  %p877 = scmp.eq.s32.totalorder %s876, 0
  %p878 = pneg %p877
  %880 = shalt.err (%p878)
  %s881 = scalar_lea.sflag [#allocation3], 1
  %882 = vsyncmov %s881
  %s883 = vpop.sfrf %882
  %p884 = scmp.eq.s32.totalorder %s883, 0
  %p885 = pneg %p884
  %887 = shalt.err (%p885)
  %s888 = scalar_lea.sflag [#allocation3], 2
  %889 = vsyncmov %s888
  %s890 = vpop.sfrf %889
  %p891 = scmp.eq.s32.totalorder %s890, 0
  %p892 = pneg %p891
  %894 = shalt.err (%p892)
  %s895 = scalar_lea.sflag [#allocation3], 3
  %896 = vsyncmov %s895
  %s897 = vpop.sfrf %896
  %p898 = scmp.eq.s32.totalorder %s897, 0
  %p899 = pneg %p898
  %901 = shalt.err (%p899)

</llo_original>
